<compile_context>
chip_gen: v7x
topology: tpu7x:2x2x1
jax: 0.10.0
libtpu: 0.0.40
codegen_flags: <defaults>
</compile_context>

<pallas_src>
import math
from functools import partial

import jax
import jax.numpy as jnp
from jax.experimental import pallas as pl
from jax.experimental.pallas import tpu as pltpu

_LANE = 128
_TARGET_BLOCK_BYTES = 2 << 20  # ~2 MiB per block (safe with double buffering)
_INT_MAX = jnp.iinfo(jnp.int32).max


# ----------------------------------------------------------------------------
# Layout helpers
# ----------------------------------------------------------------------------

def _sublane_pack(dtype):
    """Sublane packing factor: 8 for 4-byte, 16 for 2-byte, 32 for 1-byte."""
    itemsize = jnp.dtype(dtype).itemsize
    return max(8, 32 // max(itemsize, 1))


def _pick_block(n, unit_bytes, pack, target_bytes=_TARGET_BLOCK_BYTES):
    """Largest divisor of n that is a multiple of `pack` keeping the block
    under `target_bytes`; falls back to n (single, full-extent block)."""
    if n * unit_bytes <= target_bytes:
        return n
    limit = max(pack, min(n, target_bytes // max(unit_bytes, 1)))
    for b in range(limit - (limit % pack), pack - 1, -pack):
        if b > 0 and n % b == 0:
            return b
    return n


def _lane_dense_view(shape, dtype):
    """(rows, cols) factorization with lane-dense (multiple of 128) columns."""
    total = math.prod(shape) if len(shape) else 1
    if total % _LANE == 0:
        cols = _LANE
        pack = _sublane_pack(dtype)
        while cols * 2 <= 512 and total % (cols * 2 * pack) == 0:
            cols *= 2
        return total // cols, cols
    cols = shape[-1] if len(shape) else 1
    return total // cols, cols


# ----------------------------------------------------------------------------
# Elementwise activations (sigmoid / tanh / clamp)
# ----------------------------------------------------------------------------

def _elementwise_kernel(fn, x_ref, o_ref):
    o_ref[...] = fn(x_ref[...]).astype(o_ref.dtype)


def _apply_elementwise(x, fn, out_dtype=None):
    out_dtype = out_dtype or x.dtype
    rows, cols = _lane_dense_view(x.shape, x.dtype)
    x2d = x.reshape(rows, cols)
    pack = _sublane_pack(x.dtype)
    rb = _pick_block(rows, cols * jnp.dtype(x.dtype).itemsize, pack)
    out = pl.pallas_call(
        partial(_elementwise_kernel, fn),
        out_shape=jax.ShapeDtypeStruct((rows, cols), out_dtype),
        grid_spec=pltpu.PrefetchScalarGridSpec(
            num_scalar_prefetch=0,
            grid=(rows // rb,),
            in_specs=[pl.BlockSpec((rb, cols), lambda i: (i, 0))],
            out_specs=pl.BlockSpec((rb, cols), lambda i: (i, 0)),
        ),
        compiler_params=pltpu.CompilerParams(dimension_semantics=("parallel",)),
    )(x2d)
    return out.reshape(x.shape)


# ----------------------------------------------------------------------------
# Softmax / LogSoftmax over an arbitrary dim
# ----------------------------------------------------------------------------

def _softmax_rows_kernel(log, x_ref, o_ref):
    # Reduce over the trailing (lane) axis.
    x = x_ref[...].astype(jnp.float32)
    m = jnp.max(x, axis=-1, keepdims=True)
    e = jnp.exp(x - m)
    s = jnp.sum(e, axis=-1, keepdims=True)
    if log:
        out = (x - m) - jnp.log(s)
    else:
        out = e * pl.reciprocal(s, approx=True)
    o_ref[...] = out.astype(o_ref.dtype)


def _softmax_channel_kernel(log, x_ref, o_ref):
    # Block has a leading size-1 outer dim; reduce over axis 0 of the rest
    # (the channel axis); remaining dims are lane/sublane dense.
    x = x_ref[0].astype(jnp.float32)
    m = jnp.max(x, axis=0, keepdims=True)
    e = jnp.exp(x - m)
    s = jnp.sum(e, axis=0, keepdims=True)
    if log:
        out = (x - m) - jnp.log(s)
    else:
        out = e * pl.reciprocal(s, approx=True)
    o_ref[0] = out.astype(o_ref.dtype)


def _softmax_pallas(x, dim, log=False):
    if dim is None:
        # TODO(synk): torch's legacy dim=None heuristic (_get_softmax_dim) not replicated.
        dim = -1
    d = dim % x.ndim
    K = x.shape[d]
    outer = math.prod(x.shape[:d])
    inner = math.prod(x.shape[d + 1:])
    itemsize = jnp.dtype(x.dtype).itemsize
    pack = _sublane_pack(x.dtype)

    if inner == 1:
        # Reduction axis is trailing -> put it on the lanes, tile the rows.
        xv = x.reshape(outer, K)
        rb = _pick_block(outer, K * itemsize, pack)
        out = pl.pallas_call(
            partial(_softmax_rows_kernel, log),
            out_shape=jax.ShapeDtypeStruct((outer, K), x.dtype),
            grid_spec=pltpu.PrefetchScalarGridSpec(
                num_scalar_prefetch=0,
                grid=(outer // rb,),
                in_specs=[pl.BlockSpec((rb, K), lambda i: (i, 0))],
                out_specs=pl.BlockSpec((rb, K), lambda i: (i, 0)),
            ),
            compiler_params=pltpu.CompilerParams(
                dimension_semantics=("parallel",)),
        )(xv)
    elif inner % _LANE == 0:
        # Channel softmax on a fully dense 4-D view: (outer, K, R, 128);
        # the reduction over K is elementwise across dense (rt, 128) slabs.
        R = inner // _LANE
        xv = x.reshape(outer, K, R, _LANE)
        rt = _pick_block(R, K * _LANE * itemsize, pack)
        out = pl.pallas_call(
            partial(_softmax_channel_kernel, log),
            out_shape=jax.ShapeDtypeStruct((outer, K, R, _LANE), x.dtype),
            grid_spec=pltpu.PrefetchScalarGridSpec(
                num_scalar_prefetch=0,
                grid=(outer, R // rt),
                in_specs=[pl.BlockSpec((1, K, rt, _LANE),
                                       lambda i, j: (i, 0, j, 0))],
                out_specs=pl.BlockSpec((1, K, rt, _LANE),
                                       lambda i, j: (i, 0, j, 0)),
            ),
            compiler_params=pltpu.CompilerParams(
                dimension_semantics=("parallel", "parallel")),
        )(xv)
    else:
        # Ragged inner size: keep inner lane-dense as a full block.
        xv = x.reshape(outer, K, inner)
        out = pl.pallas_call(
            partial(_softmax_channel_kernel, log),
            out_shape=jax.ShapeDtypeStruct((outer, K, inner), x.dtype),
            grid_spec=pltpu.PrefetchScalarGridSpec(
                num_scalar_prefetch=0,
                grid=(outer,),
                in_specs=[pl.BlockSpec((1, K, inner), lambda i: (i, 0, 0))],
                out_specs=pl.BlockSpec((1, K, inner), lambda i: (i, 0, 0)),
            ),
            compiler_params=pltpu.CompilerParams(
                dimension_semantics=("parallel",)),
        )(xv)
    return out.reshape(x.shape)


# ----------------------------------------------------------------------------
# ArgMax over an arbitrary dim / global argmax (dim=None)
# ----------------------------------------------------------------------------

def _argmax_rows_kernel(x_ref, o_ref):
    x = x_ref[...]
    k = x.shape[-1]
    m = jnp.max(x, axis=-1, keepdims=True)
    idx = jax.lax.broadcasted_iota(jnp.int32, x.shape, x.ndim - 1)
    cand = jnp.where(x == m, idx, k)
    o_ref[...] = jnp.min(cand, axis=-1, keepdims=True).astype(o_ref.dtype)


def _argmax_channel_kernel(x_ref, o_ref):
    x = x_ref[0]
    k = x.shape[0]
    m = jnp.max(x, axis=0, keepdims=True)
    idx = jax.lax.broadcasted_iota(jnp.int32, x.shape, 0)
    cand = jnp.where(x == m, idx, k)
    o_ref[0] = jnp.min(cand, axis=0, keepdims=True).astype(o_ref.dtype)


def _argmax_flat_kernel(cols, rb, x_ref, o_ref, m_sc, i_sc):
    # Running (max, flat-index) reduction across an "arbitrary" grid axis.
    step = pl.program_id(0)

    @pl.when(step == 0)
    def _():
        m_sc[0] = jnp.float32(-jnp.inf)
        i_sc[0] = jnp.int32(_INT_MAX)

    x = x_ref[...].astype(jnp.float32)
    tile_max = jnp.max(x)
    ridx = jax.lax.broadcasted_iota(jnp.int32, x.shape, 0)
    cidx = jax.lax.broadcasted_iota(jnp.int32, x.shape, 1)
    flat = ridx * cols + cidx + step * (rb * cols)
    tile_idx = jnp.min(jnp.where(x == tile_max, flat, _INT_MAX))

    better = (tile_max > m_sc[0]) | ((tile_max == m_sc[0]) & (tile_idx < i_sc[0]))
    m_sc[0] = jnp.where(better, tile_max, m_sc[0])
    i_sc[0] = jnp.where(better, tile_idx, i_sc[0])

    @pl.when(step == pl.num_programs(0) - 1)
    def _():
        o_ref[0] = i_sc[0]


def _argmax_pallas(x, dim=None):
    # TODO(synk): NaN inputs follow max/== semantics, not torch's NaN-propagating argmax.
    itemsize = jnp.dtype(x.dtype).itemsize
    pack = _sublane_pack(x.dtype)

    if dim is None:
        rows, cols = _lane_dense_view(x.shape, x.dtype)
        x2d = x.reshape(rows, cols)
        rb = _pick_block(rows, cols * itemsize, pack)
        out = pl.pallas_call(
            partial(_argmax_flat_kernel, cols, rb),
            out_shape=jax.ShapeDtypeStruct((1,), jnp.int32),
            grid_spec=pltpu.PrefetchScalarGridSpec(
                num_scalar_prefetch=0,
                grid=(rows // rb,),
                in_specs=[pl.BlockSpec((rb, cols), lambda i: (i, 0))],
                out_specs=pl.BlockSpec(memory_space=pltpu.MemorySpace.SMEM),
                scratch_shapes=[pltpu.SMEM((1,), jnp.float32),
                                pltpu.SMEM((1,), jnp.int32)],
            ),
            compiler_params=pltpu.CompilerParams(
                dimension_semantics=("arbitrary",)),
        )(x2d)
        return out.reshape(())

    d = dim % x.ndim
    K = x.shape[d]
    outer = math.prod(x.shape[:d])
    inner = math.prod(x.shape[d + 1:])
    out_shape = x.shape[:d] + x.shape[d + 1:]

    if inner == 1:
        xv = x.reshape(outer, K)
        rb = _pick_block(outer, K * itemsize, pack)
        out = pl.pallas_call(
            _argmax_rows_kernel,
            out_shape=jax.ShapeDtypeStruct((outer, 1), jnp.int32),
            grid_spec=pltpu.PrefetchScalarGridSpec(
                num_scalar_prefetch=0,
                grid=(outer // rb,),
                in_specs=[pl.BlockSpec((rb, K), lambda i: (i, 0))],
                out_specs=pl.BlockSpec((rb, 1), lambda i: (i, 0)),
            ),
            compiler_params=pltpu.CompilerParams(
                dimension_semantics=("parallel",)),
        )(xv)
    elif inner % _LANE == 0:
        R = inner // _LANE
        xv = x.reshape(outer, K, R, _LANE)
        rt = _pick_block(R, K * _LANE * itemsize, pack)
        out = pl.pallas_call(
            _argmax_channel_kernel,
            out_shape=jax.ShapeDtypeStruct((outer, 1, R, _LANE), jnp.int32),
            grid_spec=pltpu.PrefetchScalarGridSpec(
                num_scalar_prefetch=0,
                grid=(outer, R // rt),
                in_specs=[pl.BlockSpec((1, K, rt, _LANE),
                                       lambda i, j: (i, 0, j, 0))],
                out_specs=pl.BlockSpec((1, 1, rt, _LANE),
                                       lambda i, j: (i, 0, j, 0)),
            ),
            compiler_params=pltpu.CompilerParams(
                dimension_semantics=("parallel", "parallel")),
        )(xv)
    else:
        xv = x.reshape(outer, K, inner)
        out = pl.pallas_call(
            _argmax_channel_kernel,
            out_shape=jax.ShapeDtypeStruct((outer, 1, inner), jnp.int32),
            grid_spec=pltpu.PrefetchScalarGridSpec(
                num_scalar_prefetch=0,
                grid=(outer,),
                in_specs=[pl.BlockSpec((1, K, inner), lambda i: (i, 0, 0))],
                out_specs=pl.BlockSpec((1, 1, inner), lambda i: (i, 0, 0)),
            ),
            compiler_params=pltpu.CompilerParams(
                dimension_semantics=("parallel",)),
        )(xv)
    return out.reshape(out_shape)


# ----------------------------------------------------------------------------
# Activation dispatcher (mirrors the PyTorch module)
# ----------------------------------------------------------------------------

class Activation:
    def __init__(self, name, **params):
        if name is None or name == 'identity':
            self._fn = lambda x: x  # pure passthrough, no HBM round trip
        elif name == 'sigmoid':
            self._fn = lambda x: _apply_elementwise(x, jax.nn.sigmoid)
        elif name == 'tanh':
            self._fn = lambda x: _apply_elementwise(x, jnp.tanh)
        elif name == 'softmax2d':
            self._fn = lambda x: _softmax_pallas(x, dim=1, log=False)
        elif name == 'softmax':
            dim = params.get('dim', None)
            self._fn = lambda x: _softmax_pallas(x, dim=dim, log=False)
        elif name == 'logsoftmax':
            dim = params.get('dim', None)
            self._fn = lambda x: _softmax_pallas(x, dim=dim, log=True)
        elif name == 'argmax':
            dim = params.get('dim', None)
            self._fn = lambda x: _argmax_pallas(x, dim=dim)
        elif name == 'argmax2d':
            self._fn = lambda x: _argmax_pallas(x, dim=1)
        elif name == 'clamp':
            # TODO(synk): torch.clamp with both bounds None errors; here we default to [0, 1].
            lo = params.get('min', 0.0)
            hi = params.get('max', 1.0)
            self._fn = lambda x: _apply_elementwise(x, lambda v: jnp.clip(v, lo, hi))
        elif callable(name):
            # TODO(synk): arbitrary callable activation modules cannot be auto-lowered to Pallas.
            raise NotImplementedError(
                "callable activations are not supported in the Pallas port")
        else:
            raise ValueError(
                "Activation should be callable/sigmoid/softmax/logsoftmax/"
                f"tanh/argmax/argmax2d/clamp/None; got {name}")

    def __call__(self, x):
        return self._fn(x)


# ----------------------------------------------------------------------------
# Self-test
# ----------------------------------------------------------------------------

if __name__ == "__main__":
    key = jax.random.PRNGKey(0)
    x = jax.random.normal(key, (2, 4, 16, 16), jnp.float32)

    float_cases = [
        ("identity", {}, lambda v: v, 1e-7),
        ("sigmoid", {}, jax.nn.sigmoid, 2e-5),
        ("tanh", {}, jnp.tanh, 2e-5),
        ("clamp", {"min": -0.5, "max": 0.5},
         lambda v: jnp.clip(v, -0.5, 0.5), 1e-7),
        ("softmax2d", {}, lambda v: jax.nn.softmax(v, axis=1), 5e-3),
        ("softmax", {"dim": -1}, lambda v: jax.nn.softmax(v, axis=-1), 5e-3),
        ("logsoftmax", {"dim": 1}, lambda v: jax.nn.log_softmax(v, axis=1), 1e-4),
    ]
    for name, params, ref_fn, tol in float_cases:
        act = Activation(name, **params)
        out = jax.block_until_ready(act(x))
        ref = jax.block_until_ready(ref_fn(x))
        assert out.shape == ref.shape, (name, out.shape, ref.shape)
        err = float(jnp.max(jnp.abs(out.astype(jnp.float32)
                                    - ref.astype(jnp.float32))))
        assert err <= tol, (name, err)

    # integer-output variants
    out = jax.block_until_ready(Activation("argmax2d")(x))
    ref = jnp.argmax(x, axis=1)
    assert out.shape == ref.shape and bool(jnp.all(out == ref.astype(out.dtype)))

    out = jax.block_until_ready(Activation("argmax", dim=-1)(x))
    ref = jnp.argmax(x, axis=-1)
    assert out.shape == ref.shape and bool(jnp.all(out == ref.astype(out.dtype)))

    out = jax.block_until_ready(Activation("argmax")(x))
    ref = jnp.argmax(x)
    assert out.shape == () and int(out) == int(ref)

    print("KERNEL_OK")
</pallas_src>

<mosaic_0001>
module attributes {stable_mosaic.version = 11 : i64} {
  func.func @_elementwise_kernel(%arg0: i32, %arg1: memref<8x256xf32, #tpu.memory_space<vmem>>, %arg2: memref<8x256xf32, #tpu.memory_space<vmem>>) attributes {dimension_semantics = [#tpu.dimension_semantics<parallel>], iteration_bounds = array<i64: 1>, scalar_prefetch = 0 : i64, scratch_operands = 0 : i64, tpu.core_type = #tpu.core_type<tc>, window_params = [{transform_indices = @transform_0, window_bounds = array<i64: 8, 256>}, {transform_indices = @transform_1, window_bounds = array<i64: 8, 256>}]} {
    %c0 = arith.constant 0 : index
    %c0_0 = arith.constant 0 : index
    %0 = vector.load %arg1[%c0, %c0_0] : memref<8x256xf32, #tpu.memory_space<vmem>>, vector<8x256xf32>
    %1 = arith.negf %0 : vector<8x256xf32>
    %2 = math.exp %1 : vector<8x256xf32>
    %cst = arith.constant 1.000000e+00 : f32
    %3 = vector.broadcast %cst : f32 to vector<8x256xf32>
    %4 = arith.addf %3, %2 : vector<8x256xf32>
    %5 = arith.divf %3, %4 : vector<8x256xf32>
    %c0_1 = arith.constant 0 : index
    %c0_2 = arith.constant 0 : index
    %6 = vector.load %arg2[%c0_1, %c0_2] : memref<8x256xf32, #tpu.memory_space<vmem>>, vector<8x256xf32>
    tpu.vector_store %arg2[%c0_1, %c0_2], %5 {strides = array<i32>} : memref<8x256xf32, #tpu.memory_space<vmem>>, vector<8x256xf32>,
    return
  }
  func.func @transform_0(%arg0: i32) -> (i32, i32) {
    %c0_i32 = arith.constant 0 : i32
    %c0_i32_0 = arith.constant 0 : i32
    return %arg0, %c0_i32 : i32, i32
  }
  func.func @transform_1(%arg0: i32) -> (i32, i32) {
    %c0_i32 = arith.constant 0 : i32
    %c0_i32_0 = arith.constant 0 : i32
    return %arg0, %c0_i32 : i32, i32
  }
}

</mosaic_0001>

<llo_original>
// kernel: tpu_custom_call.1
$region0: #{tpu_custom_call.1}
  #allocation0 [shape = 'u32[]', space=smem, size = 0x4, offset = 0x4, fixed_abs, tag = 'smem constant byte address 0x4 - core index']
  #allocation1 [shape = 'u32[144,128]{1,0:T(1,128)}', space=vmem, size = 0x12000, scoped, tag = 'internal scratch']
  %s0 = inlined_call_operand.hbm [shape: f32[8,256], index: 0, kind: input, shape index: {}]
  %s1 = inlined_call_operand.hbm [shape: f32[8,256], index: 1, kind: output, shape index: {}]
  %s2 = sld [smem:[#allocation0]]
  $region18: #{tpu_custom_call.1} parent=0
    _
  %s4 = ssub.s32 1, %s2
  %s5 = scalar_select 0, %s4, %s2
  $region1: #{tpu_custom_call.1} parent=0
    #allocation2 [shape = 'u8[8192]{0}', space=vmem, size = 0x2000, scoped, tag = 'input window, operand 0, single buffered']
    #allocation3 [shape = 's32[1]{0}', space=sflag, size = 0x4, scoped, tag = 'scoped memory for tpu_custom_call.1']
    #allocation4 [shape = 's32[1]{0}', space=sflag, size = 0x4, scoped, tag = 'scoped memory for tpu_custom_call.1']
    #allocation5 [shape = 'u8[8192]{0}', space=vmem, size = 0x2000, scoped, tag = 'output window, operand 0, single buffered']
    %6 = vsyncpa [#allocation3], 0
    %7 = vsyncpa [#allocation4], 0
    // Predicated region
    $region2: #{tpu_custom_call.1} parent=1 // pred_check
      _
    $region3: #{tpu_custom_call.1} parent=1 // pred_check_branch
      %9 = sbr.rel (0) target = $region5
    $region4: #{tpu_custom_call.1} parent=1 // pred_region
      %s11 = ssub.s32 256, 256
      %12 = vsyncadd [#allocation3], %s11
      %s14 = sshll.u32 [#allocation2], 4
      %s15 = int_to_ptr.vmem [resolvable:$true] %s14
      %17 = dma.hbm_to_vmem [thread:$0]  %s0, 256, %s15, [#allocation3]
    $region5: #{tpu_custom_call.1} parent=1 // pred_fallthru
      _
    // Predicated region
    $region6: #{tpu_custom_call.1} parent=1 // pred_check
      _
    $region7: #{tpu_custom_call.1} parent=1 // pred_check_branch
      %19 = sbr.rel (0) target = $region9
    $region8: #{tpu_custom_call.1} parent=1 // pred_region
      %20 = dma.done [#allocation3], 256
    $region9: #{tpu_custom_call.1} parent=1 // pred_fallthru
      _
    %v21 = vld [vmem:[#allocation2] sm:$0xff]
    %v22 = vld [vmem:[#allocation2 + $0x8] sm:$0xff]
    %v23 = vxor.u32 %v21, 2147483648
    %v24 = vxor.u32 %v22, 2147483648
    %v25 = vmul.f32 %v23, 1.442695
    %v26 = vpow.pop %v25
    %v27 = vmul.f32 %v24, 1.442695
    %v28 = vpow.pop %v27
    %v29 = vadd.f32 %v26, 1.0
    %v30 = vadd.f32 %v28, 1.0
    %v31 = vrcp.pop %v29
    %v32 = vmul.f32 1.0, %v31
    %v33 = vrcp.pop %v30
    %v34 = vmul.f32 1.0, %v33
    %35 = vst [vmem:[#allocation5] sm:$0xff] %v32
    %36 = vst [vmem:[#allocation5 + $0x8] sm:$0xff] %v34
    // Predicated region
    $region10: #{tpu_custom_call.1} parent=1 // pred_check
      _
    $region11: #{tpu_custom_call.1} parent=1 // pred_check_branch
      %38 = sbr.rel (0) target = $region13
    $region12: #{tpu_custom_call.1} parent=1 // pred_region
      %s40 = ssub.s32 256, 256
      %41 = vsyncadd [#allocation4], %s40
      %s43 = sshll.u32 [#allocation5], 4
      %s44 = int_to_ptr.vmem [resolvable:$true] %s43
      %46 = dma.vmem_to_hbm [thread:$0]  %s44, 256, %s1, [#allocation4]
    $region13: #{tpu_custom_call.1} parent=1 // pred_fallthru
      _
    // Predicated region
    $region14: #{tpu_custom_call.1} parent=1 // pred_check
      _
    $region15: #{tpu_custom_call.1} parent=1 // pred_check_branch
      %48 = sbr.rel (0) target = $region17
    $region16: #{tpu_custom_call.1} parent=1 // pred_region
      %49 = dma.done [#allocation4], 256
    $region17: #{tpu_custom_call.1} parent=1 // pred_fallthru
      _
    %50 = vsyncpa [#allocation3], 1
    %51 = vsyncpa [#allocation4], 1

</llo_original>
